<compile_context>
chip_gen: v5e
topology: v5e:2x2
jax: 0.10.0
libtpu: 0.0.40
codegen_flags: <defaults>
</compile_context>

<pallas_src>
import functools

import jax
import jax.numpy as jnp
from jax import lax
from jax.experimental import pallas as pl
from jax.experimental.pallas import tpu as pltpu


# ----------------------------------------------------------------------------
# Fused kernel: one grid step == one batch element.
# ----------------------------------------------------------------------------
def _t5_cross_attn_kernel(x_ref, ctx_ref, qmask_ref, cmask_ref,
                          wq_ref, wk_ref, wv_ref, wo_ref,
                          o_ref, acc_ref,
                          *, heads, dim_head, scale):
    """Fused forward for one batch element.

    x_ref:     (n, dim) bf16            ctx_ref:   (m, context_dim) bf16
    qmask_ref: (n, 1) int32             cmask_ref: (1, m) int32   (nonzero = keep)
    wq_ref:    (heads, dim, dim_head)   wk_ref/wv_ref: (heads, cdim, dim_head)  bf16
    wo_ref:    (inner_dim, dim) bf16    o_ref:     (n, dim) f32
    acc_ref:   (n, inner_dim) f32 VMEM scratch (per-head outputs, concatenated)
    """
    x = x_ref[...]                                   # (n, dim)    bf16
    ctx = ctx_ref[...]                               # (m, cdim)   bf16

    # masked_fill_(~mask) semantics; keep-grid built in-kernel (VPU), f32 fill
    # value (a bf16 fill of -f32max would become -inf and NaN on masked rows).
    keep = (qmask_ref[...] != 0) & (cmask_ref[...] != 0)        # (n,1)&(1,m) -> (n, m)
    mask_value = -jnp.finfo(jnp.float32).max

    # Static (unrolled) head loop: MXU pushes stay back-to-back in one grid step.
    for h in range(heads):
        lo = h * dim_head
        # Per-head projections from lane-dense weight slabs -> qh/kh/vh start at
        # lane 0 (no intra-vreg lane slicing of a wide q/k/v). bf16 in, f32 acc.
        qh = jnp.dot(x, wq_ref[h], preferred_element_type=jnp.float32) * scale   # (n, d)
        kh = jnp.dot(ctx, wk_ref[h], preferred_element_type=jnp.float32)         # (m, d)
        vh = jnp.dot(ctx, wv_ref[h], preferred_element_type=jnp.float32)         # (m, d)

        # q @ k^T without materializing a transpose: contract last axes.
        sim = lax.dot_general(qh.astype(jnp.bfloat16), kh.astype(jnp.bfloat16),
                              (((1,), (1,)), ((), ())),
                              preferred_element_type=jnp.float32)                # (n, m)
        sim = jnp.where(keep, sim, mask_value)

        # Softmax over context axis: all stats in f32; denom via EUP approx recip.
        sim = sim - jnp.max(sim, axis=-1, keepdims=True)
        p = jnp.exp(sim)
        p = p * pl.reciprocal(jnp.sum(p, axis=-1, keepdims=True), approx=True)

        # Dropout prob is 0.0 in this module config -> identity (skipped).
        head_out = jnp.dot(p.astype(jnp.bfloat16), vh.astype(jnp.bfloat16),
                           preferred_element_type=jnp.float32)                   # (n, d)
        acc_ref[:, lo:lo + dim_head] = head_out

    # Single deep-K (K = inner_dim) output projection: bf16 MXU, f32 accumulate,
    # lane-dense (n, dim) store (dim is sub-128 only at these toy sizes).
    out = jnp.dot(acc_ref[...].astype(jnp.bfloat16), wo_ref[...],
                  preferred_element_type=jnp.float32)
    o_ref[...] = out.astype(o_ref.dtype)


# ----------------------------------------------------------------------------
# Wrapper
# ----------------------------------------------------------------------------
def t5_cross_attention(x, context, wq, wk, wv, wo, mask, context_mask,
                       *, heads, dim_head):
    b, n, dim = x.shape
    _, m, context_dim = context.shape
    inner_dim = heads * dim_head
    scale = dim_head ** (-0.5)

    # bf16 MXU inputs (accumulation stays f32 inside the kernel).
    x = x.astype(jnp.bfloat16)
    context = context.astype(jnp.bfloat16)

    # Per-head weight slabs: (in_features, heads*dim_head) -> (heads, in, dim_head)
    # so every per-head projection is a lane-dense matmul (no lane slicing).
    wq_h = wq.reshape(dim, heads, dim_head).transpose(1, 0, 2).astype(jnp.bfloat16)
    wk_h = wk.reshape(context_dim, heads, dim_head).transpose(1, 0, 2).astype(jnp.bfloat16)
    wv_h = wv.reshape(context_dim, heads, dim_head).transpose(1, 0, 2).astype(jnp.bfloat16)
    wo_b = wo.astype(jnp.bfloat16)                      # kept (inner, dim) for deep-K matmul

    # Tiny per-batch integer mask vectors -- no (b, n, m) mask ever hits HBM.
    qmask = mask.astype(jnp.int32).reshape(b, n, 1)
    cmask = context_mask.astype(jnp.int32).reshape(b, 1, m)

    kernel = functools.partial(_t5_cross_attn_kernel,
                               heads=heads, dim_head=dim_head, scale=scale)

    return pl.pallas_call(
        kernel,
        out_shape=jax.ShapeDtypeStruct((b, n, dim), jnp.float32),
        grid=(b,),
        in_specs=[
            pl.BlockSpec((None, n, dim), lambda i: (i, 0, 0)),              # x
            pl.BlockSpec((None, m, context_dim), lambda i: (i, 0, 0)),      # context
            pl.BlockSpec((None, n, 1), lambda i: (i, 0, 0)),                # query mask
            pl.BlockSpec((None, 1, m), lambda i: (i, 0, 0)),                # context mask
            pl.BlockSpec((heads, dim, dim_head), lambda i: (0, 0, 0)),      # wq slabs
            pl.BlockSpec((heads, context_dim, dim_head), lambda i: (0, 0, 0)),  # wk slabs
            pl.BlockSpec((heads, context_dim, dim_head), lambda i: (0, 0, 0)),  # wv slabs
            pl.BlockSpec((inner_dim, dim), lambda i: (0, 0)),               # wo
        ],
        out_specs=pl.BlockSpec((None, n, dim), lambda i: (i, 0, 0)),
        scratch_shapes=[pltpu.VMEM((n, inner_dim), jnp.float32)],
        compiler_params=pltpu.CompilerParams(
            dimension_semantics=("parallel",),
            vmem_limit_bytes=64 * 1024 * 1024),
    )(x, context, qmask, cmask, wq_h, wk_h, wv_h, wo_b)


# ----------------------------------------------------------------------------
# Pure-JAX reference (correctness check only; f32 throughout)
# ----------------------------------------------------------------------------
def _reference(x, context, wq, wk, wv, wo, mask, context_mask, *, heads, dim_head):
    b, n, dim = x.shape
    m = context.shape[1]
    scale = dim_head ** (-0.5)
    q = (x @ wq).reshape(b, n, heads, dim_head).transpose(0, 2, 1, 3) * scale
    k = (context @ wk).reshape(b, m, heads, dim_head).transpose(0, 2, 1, 3)
    v = (context @ wv).reshape(b, m, heads, dim_head).transpose(0, 2, 1, 3)
    sim = jnp.einsum('bhid,bhjd->bhij', q, k)
    neg = -jnp.finfo(jnp.float32).max
    sim = jnp.where(mask[:, None, :, None], sim, neg)
    sim = jnp.where(context_mask[:, None, None, :], sim, neg)
    attn = jax.nn.softmax(sim, axis=-1)
    out = jnp.einsum('bhij,bhjd->bhid', attn, v)
    out = out.transpose(0, 2, 1, 3).reshape(b, n, heads * dim_head)
    return out @ wo


# ----------------------------------------------------------------------------
# Main
# ----------------------------------------------------------------------------
if __name__ == "__main__":
    # Small, module-consistent shapes.
    batch = 2
    n = 8          # query sequence length
    m = 16         # context sequence length
    dim = 32
    context_dim = 48
    heads = 4
    dim_head = 8
    inner_dim = heads * dim_head

    key = jax.random.PRNGKey(0)
    kx, kc, kq, kk, kv, ko = jax.random.split(key, 6)

    x = jax.random.normal(kx, (batch, n, dim), dtype=jnp.float32)
    context = jax.random.normal(kc, (batch, m, context_dim), dtype=jnp.float32)

    # Deterministic synthetic parameters, stored as (in_features, out_features).
    wq = 0.02 * jax.random.normal(kq, (dim, inner_dim), dtype=jnp.float32)
    wk = 0.02 * jax.random.normal(kk, (context_dim, inner_dim), dtype=jnp.float32)
    wv = 0.02 * jax.random.normal(kv, (context_dim, inner_dim), dtype=jnp.float32)
    wo = 0.02 * jax.random.normal(ko, (inner_dim, dim), dtype=jnp.float32)

    # Masks: keep most positions, mask out the tail (True = keep, as in PyTorch).
    mask = jnp.ones((batch, n), dtype=bool).at[:, -2:].set(False)
    context_mask = jnp.ones((batch, m), dtype=bool).at[:, -4:].set(False)

    out = t5_cross_attention(x, context, wq, wk, wv, wo, mask, context_mask,
                             heads=heads, dim_head=dim_head)
    out = jax.block_until_ready(out)

    ref = _reference(x, context, wq, wk, wv, wo, mask, context_mask,
                     heads=heads, dim_head=dim_head)
    assert out.shape == (batch, n, dim)
    # Tolerance accounts for bf16 MXU inputs (f32 accumulation) and the EUP
    # approximate reciprocal in the softmax denominator.
    assert jnp.allclose(out, ref, atol=2e-2, rtol=2e-2), "mismatch vs reference"

    print("KERNEL_OK")
</pallas_src>

<mosaic_0001>
module attributes {stable_mosaic.version = 11 : i64} {
  func.func @_t5_cross_attn_kernel(%arg0: i32, %arg1: memref<1x8x32xbf16, #tpu.memory_space<vmem>>, %arg2: memref<1x16x48xbf16, #tpu.memory_space<vmem>>, %arg3: memref<1x8x1xi32, #tpu.memory_space<vmem>>, %arg4: memref<1x1x16xi32, #tpu.memory_space<vmem>>, %arg5: memref<4x32x8xbf16, #tpu.memory_space<vmem>>, %arg6: memref<4x48x8xbf16, #tpu.memory_space<vmem>>, %arg7: memref<4x48x8xbf16, #tpu.memory_space<vmem>>, %arg8: memref<32x32xbf16, #tpu.memory_space<vmem>>, %arg9: memref<1x8x32xf32, #tpu.memory_space<vmem>>, %arg10: memref<8x32xf32, #tpu.memory_space<vmem>>) attributes {dimension_semantics = [#tpu.dimension_semantics<parallel>], iteration_bounds = array<i64: 2>, scalar_prefetch = 0 : i64, scratch_operands = 1 : i64, tpu.core_type = #tpu.core_type<tc>, window_params = [{transform_indices = @transform_0, window_bounds = array<i64: 1, 8, 32>}, {transform_indices = @transform_1, window_bounds = array<i64: 1, 16, 48>}, {transform_indices = @transform_2, window_bounds = array<i64: 1, 8, 1>}, {transform_indices = @transform_3, window_bounds = array<i64: 1, 1, 16>}, {pipeline_mode = #tpu.pipeline_mode<synchronous>, transform_indices = @transform_4, window_bounds = array<i64: 4, 32, 8>}, {pipeline_mode = #tpu.pipeline_mode<synchronous>, transform_indices = @transform_5, window_bounds = array<i64: 4, 48, 8>}, {pipeline_mode = #tpu.pipeline_mode<synchronous>, transform_indices = @transform_6, window_bounds = array<i64: 4, 48, 8>}, {pipeline_mode = #tpu.pipeline_mode<synchronous>, transform_indices = @transform_7, window_bounds = array<i64: 32, 32>}, {transform_indices = @transform_8, window_bounds = array<i64: 1, 8, 32>}]} {
    %c0 = arith.constant 0 : index
    %c0_0 = arith.constant 0 : index
    %c0_1 = arith.constant 0 : index
    %0 = vector.load %arg1[%c0, %c0_0, %c0_1] : memref<1x8x32xbf16, #tpu.memory_space<vmem>>, vector<1x8x32xbf16>
    %1 = vector.shape_cast %0 : vector<1x8x32xbf16> to vector<8x32xbf16>
    %c0_2 = arith.constant 0 : index
    %c0_3 = arith.constant 0 : index
    %c0_4 = arith.constant 0 : index
    %2 = vector.load %arg2[%c0_2, %c0_3, %c0_4] : memref<1x16x48xbf16, #tpu.memory_space<vmem>>, vector<1x16x48xbf16>
    %3 = vector.shape_cast %2 : vector<1x16x48xbf16> to vector<16x48xbf16>
    %c0_5 = arith.constant 0 : index
    %c0_6 = arith.constant 0 : index
    %c0_7 = arith.constant 0 : index
    %4 = vector.load %arg3[%c0_5, %c0_6, %c0_7] : memref<1x8x1xi32, #tpu.memory_space<vmem>>, vector<1x8x1xi32>
    %5 = vector.shape_cast %4 : vector<1x8x1xi32> to vector<8x1xi32>
    %c0_i32 = arith.constant 0 : i32
    %6 = vector.broadcast %c0_i32 : i32 to vector<8x1xi32>
    %7 = arith.cmpi ne, %5, %6 : vector<8x1xi32>
    %c0_8 = arith.constant 0 : index
    %c0_9 = arith.constant 0 : index
    %c0_10 = arith.constant 0 : index
    %8 = vector.load %arg4[%c0_8, %c0_9, %c0_10] : memref<1x1x16xi32, #tpu.memory_space<vmem>>, vector<1x1x16xi32>
    %9 = vector.shape_cast %8 : vector<1x1x16xi32> to vector<1x16xi32>
    %c0_i32_11 = arith.constant 0 : i32
    %10 = vector.broadcast %c0_i32_11 : i32 to vector<1x16xi32>
    %11 = arith.cmpi ne, %9, %10 : vector<1x16xi32>
    %12 = vector.broadcast %7 : vector<8x1xi1> to vector<8x16xi1>
    %13 = vector.broadcast %11 : vector<1x16xi1> to vector<8x16xi1>
    %14 = arith.andi %12, %13 : vector<8x16xi1>
    %c0_12 = arith.constant 0 : index
    %c0_13 = arith.constant 0 : index
    %c0_14 = arith.constant 0 : index
    %15 = vector.load %arg5[%c0_12, %c0_13, %c0_14] : memref<4x32x8xbf16, #tpu.memory_space<vmem>>, vector<1x32x8xbf16>
    %16 = vector.shape_cast %15 : vector<1x32x8xbf16> to vector<32x8xbf16>
    %cst = arith.constant dense<0.000000e+00> : vector<8x8xf32>
    %17 = tpu.matmul %1, %16, %cst {dimension_numbers = #tpu.dot_dimension_numbers<[1], [0], [0], [1], [0, 0, 1, 1], [], []>} : vector<8x32xbf16>, vector<32x8xbf16>, vector<8x8xf32> -> vector<8x8xf32>
    %cst_15 = arith.constant 0.353553385 : f32
    %18 = vector.broadcast %cst_15 : f32 to vector<8x8xf32>
    %19 = arith.mulf %17, %18 : vector<8x8xf32>
    %c0_16 = arith.constant 0 : index
    %c0_17 = arith.constant 0 : index
    %c0_18 = arith.constant 0 : index
    %20 = vector.load %arg6[%c0_16, %c0_17, %c0_18] : memref<4x48x8xbf16, #tpu.memory_space<vmem>>, vector<1x48x8xbf16>
    %21 = vector.shape_cast %20 : vector<1x48x8xbf16> to vector<48x8xbf16>
    %cst_19 = arith.constant dense<0.000000e+00> : vector<16x8xf32>
    %22 = tpu.matmul %3, %21, %cst_19 {dimension_numbers = #tpu.dot_dimension_numbers<[1], [0], [0], [1], [0, 0, 1, 1], [], []>} : vector<16x48xbf16>, vector<48x8xbf16>, vector<16x8xf32> -> vector<16x8xf32>
    %c0_20 = arith.constant 0 : index
    %c0_21 = arith.constant 0 : index
    %c0_22 = arith.constant 0 : index
    %23 = vector.load %arg7[%c0_20, %c0_21, %c0_22] : memref<4x48x8xbf16, #tpu.memory_space<vmem>>, vector<1x48x8xbf16>
    %24 = vector.shape_cast %23 : vector<1x48x8xbf16> to vector<48x8xbf16>
    %cst_23 = arith.constant dense<0.000000e+00> : vector<16x8xf32>
    %25 = tpu.matmul %3, %24, %cst_23 {dimension_numbers = #tpu.dot_dimension_numbers<[1], [0], [0], [1], [0, 0, 1, 1], [], []>} : vector<16x48xbf16>, vector<48x8xbf16>, vector<16x8xf32> -> vector<16x8xf32>
    %26 = arith.truncf %19 : vector<8x8xf32> to vector<8x8xbf16>
    %27 = arith.truncf %22 : vector<16x8xf32> to vector<16x8xbf16>
    %cst_24 = arith.constant dense<0.000000e+00> : vector<8x16xf32>
    %28 = tpu.matmul %26, %27, %cst_24 {dimension_numbers = #tpu.dot_dimension_numbers<[1], [1], [0], [0], [0, 0, 1, 0], [], []>} : vector<8x8xbf16>, vector<16x8xbf16>, vector<8x16xf32> -> vector<8x16xf32>
    %cst_25 = arith.constant -3.40282347E+38 : f32
    %29 = vector.broadcast %cst_25 : f32 to vector<8x16xf32>
    %30 = arith.select %14, %28, %29 : vector<8x16xi1>, vector<8x16xf32>
    %cst_26 = arith.constant dense<0xFF800000> : vector<8xf32>
    %31 = vector.multi_reduction <maximumf>, %30, %cst_26 [1] : vector<8x16xf32> to vector<8xf32>
    %32 = vector.shape_cast %31 : vector<8xf32> to vector<8x1xf32>
    %33 = vector.broadcast %32 : vector<8x1xf32> to vector<8x16xf32>
    %34 = arith.subf %30, %33 : vector<8x16xf32>
    %35 = math.exp %34 : vector<8x16xf32>
    %cst_27 = arith.constant dense<0.000000e+00> : vector<8xf32>
    %36 = vector.multi_reduction <add>, %35, %cst_27 [1] : vector<8x16xf32> to vector<8xf32>
    %37 = vector.shape_cast %36 : vector<8xf32> to vector<8x1xf32>
    %38 = tpu.reciprocal %37 {approx = true} : vector<8x1xf32> -> vector<8x1xf32>
    %39 = vector.broadcast %38 : vector<8x1xf32> to vector<8x16xf32>
    %40 = arith.mulf %35, %39 : vector<8x16xf32>
    %41 = arith.truncf %40 : vector<8x16xf32> to vector<8x16xbf16>
    %42 = arith.truncf %25 : vector<16x8xf32> to vector<16x8xbf16>
    %cst_28 = arith.constant dense<0.000000e+00> : vector<8x8xf32>
    %43 = tpu.matmul %41, %42, %cst_28 {dimension_numbers = #tpu.dot_dimension_numbers<[1], [0], [0], [1], [0, 0, 1, 1], [], []>} : vector<8x16xbf16>, vector<16x8xbf16>, vector<8x8xf32> -> vector<8x8xf32>
    %c0_29 = arith.constant 0 : index
    %c0_30 = arith.constant 0 : index
    %44 = vector.load %arg10[%c0_29, %c0_30] : memref<8x32xf32, #tpu.memory_space<vmem>>, vector<8x8xf32>
    tpu.vector_store %arg10[%c0_29, %c0_30], %43 {strides = array<i32>} : memref<8x32xf32, #tpu.memory_space<vmem>>, vector<8x8xf32>,
    %c1 = arith.constant 1 : index
    %c0_31 = arith.constant 0 : index
    %c0_32 = arith.constant 0 : index
    %45 = vector.load %arg5[%c1, %c0_31, %c0_32] : memref<4x32x8xbf16, #tpu.memory_space<vmem>>, vector<1x32x8xbf16>
    %46 = vector.shape_cast %45 : vector<1x32x8xbf16> to vector<32x8xbf16>
    %cst_33 = arith.constant dense<0.000000e+00> : vector<8x8xf32>
    %47 = tpu.matmul %1, %46, %cst_33 {dimension_numbers = #tpu.dot_dimension_numbers<[1], [0], [0], [1], [0, 0, 1, 1], [], []>} : vector<8x32xbf16>, vector<32x8xbf16>, vector<8x8xf32> -> vector<8x8xf32>
    %cst_34 = arith.constant 0.353553385 : f32
    %48 = vector.broadcast %cst_34 : f32 to vector<8x8xf32>
    %49 = arith.mulf %47, %48 : vector<8x8xf32>
    %c1_35 = arith.constant 1 : index
    %c0_36 = arith.constant 0 : index
    %c0_37 = arith.constant 0 : index
    %50 = vector.load %arg6[%c1_35, %c0_36, %c0_37] : memref<4x48x8xbf16, #tpu.memory_space<vmem>>, vector<1x48x8xbf16>
    %51 = vector.shape_cast %50 : vector<1x48x8xbf16> to vector<48x8xbf16>
    %cst_38 = arith.constant dense<0.000000e+00> : vector<16x8xf32>
    %52 = tpu.matmul %3, %51, %cst_38 {dimension_numbers = #tpu.dot_dimension_numbers<[1], [0], [0], [1], [0, 0, 1, 1], [], []>} : vector<16x48xbf16>, vector<48x8xbf16>, vector<16x8xf32> -> vector<16x8xf32>
    %c1_39 = arith.constant 1 : index
    %c0_40 = arith.constant 0 : index
    %c0_41 = arith.constant 0 : index
    %53 = vector.load %arg7[%c1_39, %c0_40, %c0_41] : memref<4x48x8xbf16, #tpu.memory_space<vmem>>, vector<1x48x8xbf16>
    %54 = vector.shape_cast %53 : vector<1x48x8xbf16> to vector<48x8xbf16>
    %cst_42 = arith.constant dense<0.000000e+00> : vector<16x8xf32>
    %55 = tpu.matmul %3, %54, %cst_42 {dimension_numbers = #tpu.dot_dimension_numbers<[1], [0], [0], [1], [0, 0, 1, 1], [], []>} : vector<16x48xbf16>, vector<48x8xbf16>, vector<16x8xf32> -> vector<16x8xf32>
    %56 = arith.truncf %49 : vector<8x8xf32> to vector<8x8xbf16>
    %57 = arith.truncf %52 : vector<16x8xf32> to vector<16x8xbf16>
    %cst_43 = arith.constant dense<0.000000e+00> : vector<8x16xf32>
    %58 = tpu.matmul %56, %57, %cst_43 {dimension_numbers = #tpu.dot_dimension_numbers<[1], [1], [0], [0], [0, 0, 1, 0], [], []>} : vector<8x8xbf16>, vector<16x8xbf16>, vector<8x16xf32> -> vector<8x16xf32>
    %cst_44 = arith.constant -3.40282347E+38 : f32
    %59 = vector.broadcast %cst_44 : f32 to vector<8x16xf32>
    %60 = arith.select %14, %58, %59 : vector<8x16xi1>, vector<8x16xf32>
    %cst_45 = arith.constant dense<0xFF800000> : vector<8xf32>
    %61 = vector.multi_reduction <maximumf>, %60, %cst_45 [1] : vector<8x16xf32> to vector<8xf32>
    %62 = vector.shape_cast %61 : vector<8xf32> to vector<8x1xf32>
    %63 = vector.broadcast %62 : vector<8x1xf32> to vector<8x16xf32>
    %64 = arith.subf %60, %63 : vector<8x16xf32>
    %65 = math.exp %64 : vector<8x16xf32>
    %cst_46 = arith.constant dense<0.000000e+00> : vector<8xf32>
    %66 = vector.multi_reduction <add>, %65, %cst_46 [1] : vector<8x16xf32> to vector<8xf32>
    %67 = vector.shape_cast %66 : vector<8xf32> to vector<8x1xf32>
    %68 = tpu.reciprocal %67 {approx = true} : vector<8x1xf32> -> vector<8x1xf32>
    %69 = vector.broadcast %68 : vector<8x1xf32> to vector<8x16xf32>
    %70 = arith.mulf %65, %69 : vector<8x16xf32>
    %71 = arith.truncf %70 : vector<8x16xf32> to vector<8x16xbf16>
    %72 = arith.truncf %55 : vector<16x8xf32> to vector<16x8xbf16>
    %cst_47 = arith.constant dense<0.000000e+00> : vector<8x8xf32>
    %73 = tpu.matmul %71, %72, %cst_47 {dimension_numbers = #tpu.dot_dimension_numbers<[1], [0], [0], [1], [0, 0, 1, 1], [], []>} : vector<8x16xbf16>, vector<16x8xbf16>, vector<8x8xf32> -> vector<8x8xf32>
    %c0_48 = arith.constant 0 : index
    %c8 = arith.constant 8 : index
    %74 = vector.load %arg10[%c0_48, %c8] : memref<8x32xf32, #tpu.memory_space<vmem>>, vector<8x8xf32>
    tpu.vector_store %arg10[%c0_48, %c8], %73 {strides = array<i32>} : memref<8x32xf32, #tpu.memory_space<vmem>>, vector<8x8xf32>,
    %c2 = arith.constant 2 : index
    %c0_49 = arith.constant 0 : index
    %c0_50 = arith.constant 0 : index
    %75 = vector.load %arg5[%c2, %c0_49, %c0_50] : memref<4x32x8xbf16, #tpu.memory_space<vmem>>, vector<1x32x8xbf16>
    %76 = vector.shape_cast %75 : vector<1x32x8xbf16> to vector<32x8xbf16>
    %cst_51 = arith.constant dense<0.000000e+00> : vector<8x8xf32>
    %77 = tpu.matmul %1, %76, %cst_51 {dimension_numbers = #tpu.dot_dimension_numbers<[1], [0], [0], [1], [0, 0, 1, 1], [], []>} : vector<8x32xbf16>, vector<32x8xbf16>, vector<8x8xf32> -> vector<8x8xf32>
    %cst_52 = arith.constant 0.353553385 : f32
    %78 = vector.broadcast %cst_52 : f32 to vector<8x8xf32>
    %79 = arith.mulf %77, %78 : vector<8x8xf32>
    %c2_53 = arith.constant 2 : index
    %c0_54 = arith.constant 0 : index
    %c0_55 = arith.constant 0 : index
    %80 = vector.load %arg6[%c2_53, %c0_54, %c0_55] : memref<4x48x8xbf16, #tpu.memory_space<vmem>>, vector<1x48x8xbf16>
    %81 = vector.shape_cast %80 : vector<1x48x8xbf16> to vector<48x8xbf16>
    %cst_56 = arith.constant dense<0.000000e+00> : vector<16x8xf32>
    %82 = tpu.matmul %3, %81, %cst_56 {dimension_numbers = #tpu.dot_dimension_numbers<[1], [0], [0], [1], [0, 0, 1, 1], [], []>} : vector<16x48xbf16>, vector<48x8xbf16>, vector<16x8xf32> -> vector<16x8xf32>
    %c2_57 = arith.constant 2 : index
    %c0_58 = arith.constant 0 : index
    %c0_59 = arith.constant 0 : index
    %83 = vector.load %arg7[%c2_57, %c0_58, %c0_59] : memref<4x48x8xbf16, #tpu.memory_space<vmem>>, vector<1x48x8xbf16>
    %84 = vector.shape_cast %83 : vector<1x48x8xbf16> to vector<48x8xbf16>
    %cst_60 = arith.constant dense<0.000000e+00> : vector<16x8xf32>
    %85 = tpu.matmul %3, %84, %cst_60 {dimension_numbers = #tpu.dot_dimension_numbers<[1], [0], [0], [1], [0, 0, 1, 1], [], []>} : vector<16x48xbf16>, vector<48x8xbf16>, vector<16x8xf32> -> vector<16x8xf32>
    %86 = arith.truncf %79 : vector<8x8xf32> to vector<8x8xbf16>
    %87 = arith.truncf %82 : vector<16x8xf32> to vector<16x8xbf16>
    %cst_61 = arith.constant dense<0.000000e+00> : vector<8x16xf32>
    %88 = tpu.matmul %86, %87, %cst_61 {dimension_numbers = #tpu.dot_dimension_numbers<[1], [1], [0], [0], [0, 0, 1, 0], [], []>} : vector<8x8xbf16>, vector<16x8xbf16>, vector<8x16xf32> -> vector<8x16xf32>
    %cst_62 = arith.constant -3.40282347E+38 : f32
    %89 = vector.broadcast %cst_62 : f32 to vector<8x16xf32>
    %90 = arith.select %14, %88, %89 : vector<8x16xi1>, vector<8x16xf32>
    %cst_63 = arith.constant dense<0xFF800000> : vector<8xf32>
    %91 = vector.multi_reduction <maximumf>, %90, %cst_63 [1] : vector<8x16xf32> to vector<8xf32>
    %92 = vector.shape_cast %91 : vector<8xf32> to vector<8x1xf32>
    %93 = vector.broadcast %92 : vector<8x1xf32> to vector<8x16xf32>
    %94 = arith.subf %90, %93 : vector<8x16xf32>
    %95 = math.exp %94 : vector<8x16xf32>
    %cst_64 = arith.constant dense<0.000000e+00> : vector<8xf32>
    %96 = vector.multi_reduction <add>, %95, %cst_64 [1] : vector<8x16xf32> to vector<8xf32>
    %97 = vector.shape_cast %96 : vector<8xf32> to vector<8x1xf32>
    %98 = tpu.reciprocal %97 {approx = true} : vector<8x1xf32> -> vector<8x1xf32>
    %99 = vector.broadcast %98 : vector<8x1xf32> to vector<8x16xf32>
    %100 = arith.mulf %95, %99 : vector<8x16xf32>
    %101 = arith.truncf %100 : vector<8x16xf32> to vector<8x16xbf16>
    %102 = arith.truncf %85 : vector<16x8xf32> to vector<16x8xbf16>
    %cst_65 = arith.constant dense<0.000000e+00> : vector<8x8xf32>
    %103 = tpu.matmul %101, %102, %cst_65 {dimension_numbers = #tpu.dot_dimension_numbers<[1], [0], [0], [1], [0, 0, 1, 1], [], []>} : vector<8x16xbf16>, vector<16x8xbf16>, vector<8x8xf32> -> vector<8x8xf32>
    %c0_66 = arith.constant 0 : index
    %c16 = arith.constant 16 : index
    %104 = vector.load %arg10[%c0_66, %c16] : memref<8x32xf32, #tpu.memory_space<vmem>>, vector<8x8xf32>
    tpu.vector_store %arg10[%c0_66, %c16], %103 {strides = array<i32>} : memref<8x32xf32, #tpu.memory_space<vmem>>, vector<8x8xf32>,
    %c3 = arith.constant 3 : index
    %c0_67 = arith.constant 0 : index
    %c0_68 = arith.constant 0 : index
    %105 = vector.load %arg5[%c3, %c0_67, %c0_68] : memref<4x32x8xbf16, #tpu.memory_space<vmem>>, vector<1x32x8xbf16>
    %106 = vector.shape_cast %105 : vector<1x32x8xbf16> to vector<32x8xbf16>
    %cst_69 = arith.constant dense<0.000000e+00> : vector<8x8xf32>
    %107 = tpu.matmul %1, %106, %cst_69 {dimension_numbers = #tpu.dot_dimension_numbers<[1], [0], [0], [1], [0, 0, 1, 1], [], []>} : vector<8x32xbf16>, vector<32x8xbf16>, vector<8x8xf32> -> vector<8x8xf32>
    %cst_70 = arith.constant 0.353553385 : f32
    %108 = vector.broadcast %cst_70 : f32 to vector<8x8xf32>
    %109 = arith.mulf %107, %108 : vector<8x8xf32>
    %c3_71 = arith.constant 3 : index
    %c0_72 = arith.constant 0 : index
    %c0_73 = arith.constant 0 : index
    %110 = vector.load %arg6[%c3_71, %c0_72, %c0_73] : memref<4x48x8xbf16, #tpu.memory_space<vmem>>, vector<1x48x8xbf16>
    %111 = vector.shape_cast %110 : vector<1x48x8xbf16> to vector<48x8xbf16>
    %cst_74 = arith.constant dense<0.000000e+00> : vector<16x8xf32>
    %112 = tpu.matmul %3, %111, %cst_74 {dimension_numbers = #tpu.dot_dimension_numbers<[1], [0], [0], [1], [0, 0, 1, 1], [], []>} : vector<16x48xbf16>, vector<48x8xbf16>, vector<16x8xf32> -> vector<16x8xf32>
    %c3_75 = arith.constant 3 : index
    %c0_76 = arith.constant 0 : index
    %c0_77 = arith.constant 0 : index
    %113 = vector.load %arg7[%c3_75, %c0_76, %c0_77] : memref<4x48x8xbf16, #tpu.memory_space<vmem>>, vector<1x48x8xbf16>
    %114 = vector.shape_cast %113 : vector<1x48x8xbf16> to vector<48x8xbf16>
    %cst_78 = arith.constant dense<0.000000e+00> : vector<16x8xf32>
    %115 = tpu.matmul %3, %114, %cst_78 {dimension_numbers = #tpu.dot_dimension_numbers<[1], [0], [0], [1], [0, 0, 1, 1], [], []>} : vector<16x48xbf16>, vector<48x8xbf16>, vector<16x8xf32> -> vector<16x8xf32>
    %116 = arith.truncf %109 : vector<8x8xf32> to vector<8x8xbf16>
    %117 = arith.truncf %112 : vector<16x8xf32> to vector<16x8xbf16>
    %cst_79 = arith.constant dense<0.000000e+00> : vector<8x16xf32>
    %118 = tpu.matmul %116, %117, %cst_79 {dimension_numbers = #tpu.dot_dimension_numbers<[1], [1], [0], [0], [0, 0, 1, 0], [], []>} : vector<8x8xbf16>, vector<16x8xbf16>, vector<8x16xf32> -> vector<8x16xf32>
    %cst_80 = arith.constant -3.40282347E+38 : f32
    %119 = vector.broadcast %cst_80 : f32 to vector<8x16xf32>
    %120 = arith.select %14, %118, %119 : vector<8x16xi1>, vector<8x16xf32>
    %cst_81 = arith.constant dense<0xFF800000> : vector<8xf32>
    %121 = vector.multi_reduction <maximumf>, %120, %cst_81 [1] : vector<8x16xf32> to vector<8xf32>
    %122 = vector.shape_cast %121 : vector<8xf32> to vector<8x1xf32>
    %123 = vector.broadcast %122 : vector<8x1xf32> to vector<8x16xf32>
    %124 = arith.subf %120, %123 : vector<8x16xf32>
    %125 = math.exp %124 : vector<8x16xf32>
    %cst_82 = arith.constant dense<0.000000e+00> : vector<8xf32>
    %126 = vector.multi_reduction <add>, %125, %cst_82 [1] : vector<8x16xf32> to vector<8xf32>
    %127 = vector.shape_cast %126 : vector<8xf32> to vector<8x1xf32>
    %128 = tpu.reciprocal %127 {approx = true} : vector<8x1xf32> -> vector<8x1xf32>
    %129 = vector.broadcast %128 : vector<8x1xf32> to vector<8x16xf32>
    %130 = arith.mulf %125, %129 : vector<8x16xf32>
    %131 = arith.truncf %130 : vector<8x16xf32> to vector<8x16xbf16>
    %132 = arith.truncf %115 : vector<16x8xf32> to vector<16x8xbf16>
    %cst_83 = arith.constant dense<0.000000e+00> : vector<8x8xf32>
    %133 = tpu.matmul %131, %132, %cst_83 {dimension_numbers = #tpu.dot_dimension_numbers<[1], [0], [0], [1], [0, 0, 1, 1], [], []>} : vector<8x16xbf16>, vector<16x8xbf16>, vector<8x8xf32> -> vector<8x8xf32>
    %c0_84 = arith.constant 0 : index
    %c24 = arith.constant 24 : index
    %134 = vector.load %arg10[%c0_84, %c24] : memref<8x32xf32, #tpu.memory_space<vmem>>, vector<8x8xf32>
    tpu.vector_store %arg10[%c0_84, %c24], %133 {strides = array<i32>} : memref<8x32xf32, #tpu.memory_space<vmem>>, vector<8x8xf32>,
    %c0_85 = arith.constant 0 : index
    %c0_86 = arith.constant 0 : index
    %135 = vector.load %arg10[%c0_85, %c0_86] : memref<8x32xf32, #tpu.memory_space<vmem>>, vector<8x32xf32>
    %136 = arith.truncf %135 : vector<8x32xf32> to vector<8x32xbf16>
    %c0_87 = arith.constant 0 : index
    %c0_88 = arith.constant 0 : index
    %137 = vector.load %arg8[%c0_87, %c0_88] : memref<32x32xbf16, #tpu.memory_space<vmem>>, vector<32x32xbf16>
    %cst_89 = arith.constant dense<0.000000e+00> : vector<8x32xf32>
    %138 = tpu.matmul %136, %137, %cst_89 {dimension_numbers = #tpu.dot_dimension_numbers<[1], [0], [0], [1], [0, 0, 1, 1], [], []>} : vector<8x32xbf16>, vector<32x32xbf16>, vector<8x32xf32> -> vector<8x32xf32>
    %c0_90 = arith.constant 0 : index
    %c0_91 = arith.constant 0 : index
    %c0_92 = arith.constant 0 : index
    %139 = vector.load %arg9[%c0_90, %c0_91, %c0_92] : memref<1x8x32xf32, #tpu.memory_space<vmem>>, vector<1x8x32xf32>
    %140 = vector.shape_cast %139 : vector<1x8x32xf32> to vector<8x32xf32>
    %141 = vector.shape_cast %138 : vector<8x32xf32> to vector<1x8x32xf32>
    tpu.vector_store %arg9[%c0_90, %c0_91, %c0_92], %141 {strides = array<i32>} : memref<1x8x32xf32, #tpu.memory_space<vmem>>, vector<1x8x32xf32>,
    return
  }
  func.func @transform_0(%arg0: i32) -> (i32, i32, i32) {
    %c0_i32 = arith.constant 0 : i32
    %c0_i32_0 = arith.constant 0 : i32
    %c0_i32_1 = arith.constant 0 : i32
    return %arg0, %c0_i32, %c0_i32_0 : i32, i32, i32
  }
  func.func @transform_1(%arg0: i32) -> (i32, i32, i32) {
    %c0_i32 = arith.constant 0 : i32
    %c0_i32_0 = arith.constant 0 : i32
    %c0_i32_1 = arith.constant 0 : i32
    return %arg0, %c0_i32, %c0_i32_0 : i32, i32, i32
  }
  func.func @transform_2(%arg0: i32) -> (i32, i32, i32) {
    %c0_i32 = arith.constant 0 : i32
    %c0_i32_0 = arith.constant 0 : i32
    %c0_i32_1 = arith.constant 0 : i32
    return %arg0, %c0_i32, %c0_i32_0 : i32, i32, i32
  }
  func.func @transform_3(%arg0: i32) -> (i32, i32, i32) {
    %c0_i32 = arith.constant 0 : i32
    %c0_i32_0 = arith.constant 0 : i32
    %c0_i32_1 = arith.constant 0 : i32
    return %arg0, %c0_i32, %c0_i32_0 : i32, i32, i32
  }
  func.func @transform_4(%arg0: i32) -> (i32, i32, i32) {
    %c0_i32 = arith.constant 0 : i32
    %c0_i32_0 = arith.constant 0 : i32
    %c0_i32_1 = arith.constant 0 : i32
    %c0_i32_2 = arith.constant 0 : i32
    return %c0_i32, %c0_i32_0, %c0_i32_1 : i32, i32, i32
  }
  func.func @transform_5(%arg0: i32) -> (i32, i32, i32) {
    %c0_i32 = arith.constant 0 : i32
    %c0_i32_0 = arith.constant 0 : i32
    %c0_i32_1 = arith.constant 0 : i32
    %c0_i32_2 = arith.constant 0 : i32
    return %c0_i32, %c0_i32_0, %c0_i32_1 : i32, i32, i32
  }
  func.func @transform_6(%arg0: i32) -> (i32, i32, i32) {
    %c0_i32 = arith.constant 0 : i32
    %c0_i32_0 = arith.constant 0 : i32
    %c0_i32_1 = arith.constant 0 : i32
    %c0_i32_2 = arith.constant 0 : i32
    return %c0_i32, %c0_i32_0, %c0_i32_1 : i32, i32, i32
  }
  func.func @transform_7(%arg0: i32) -> (i32, i32) {
    %c0_i32 = arith.constant 0 : i32
    %c0_i32_0 = arith.constant 0 : i32
    %c0_i32_1 = arith.constant 0 : i32
    return %c0_i32, %c0_i32_0 : i32, i32
  }
  func.func @transform_8(%arg0: i32) -> (i32, i32, i32) {
    %c0_i32 = arith.constant 0 : i32
    %c0_i32_0 = arith.constant 0 : i32
    %c0_i32_1 = arith.constant 0 : i32
    return %arg0, %c0_i32, %c0_i32_0 : i32, i32, i32
  }
}

</mosaic_0001>

<llo_original>
// kernel: tpu_custom_call.1
$region0: #{tpu_custom_call.1}
  #allocation0 [shape = 'u32[]', space=smem, size = 0x4, offset = 0x4, fixed_abs, tag = 'smem constant byte address 0x4 - core index']
  #allocation1 [shape = 'u32[72,128]{1,0:T(1,128)}', space=vmem, size = 0x9000, scoped, tag = 'internal scratch']
  #allocation2 [shape = 'f32[8,32]{1,0:T(8,128)}', space=vmem, size = 0x1000, scoped, tag = 'scratch operand']
  %s0 = inlined_call_operand.vmem [shape: bf16[2,8,32], index: 0, kind: input, shape index: {}]
  %s1 = inlined_call_operand.vmem [shape: bf16[2,16,48], index: 1, kind: input, shape index: {}]
  %s2 = inlined_call_operand.vmem [shape: s32[2,8,1], index: 2, kind: input, shape index: {}]
  %s3 = inlined_call_operand.vmem [shape: s32[2,1,16], index: 3, kind: input, shape index: {}]
  %s4 = inlined_call_operand.vmem [shape: bf16[4,32,8], index: 4, kind: input, shape index: {}]
  %s5 = inlined_call_operand.vmem [shape: bf16[4,48,8], index: 5, kind: input, shape index: {}]
  %s6 = inlined_call_operand.vmem [shape: bf16[4,48,8], index: 6, kind: input, shape index: {}]
  %s7 = inlined_call_operand.vmem [shape: bf16[32,32], index: 7, kind: input, shape index: {}]
  %s8 = inlined_call_operand.hbm [shape: f32[2,8,32], index: 8, kind: output, shape index: {}]
  %s9 = sld [smem:[#allocation0]]
  $region65: #{tpu_custom_call.1} parent=0
    _
  %s11 = ssub.s32 1, %s9
  %s12 = scalar_select 0, %s11, %s9
  $region1: #{tpu_custom_call.1} parent=0
    #allocation3 [shape = 'u8[8192]{0}', space=vmem, size = 0x2000, scoped, tag = 'output window, operand 0']
    #allocation4 [shape = 's32[2]{0}', space=sflag, size = 0x8, scoped, tag = 'scoped memory for tpu_custom_call.1']
    %13 = vsyncpa [#allocation4], 0
    %s14 = scalar_lea.sflag [#allocation4], 1
    %15 = vsyncpa %s14, 0
    loop: start=0, step=1, limit=4
    $region2: #{tpu_custom_call.1} parent=1 // loop_pre_header
      _
    $region3: #{tpu_custom_call.1} parent=1 // loop_header
      %s17 = sphi 0, %s21
      %p18 = scmp.ge.s32.totalorder %s17, 4
      %s27 = sphi 0, %s29
      %s30 = sphi 0, %s27
      %s31 = sphi 0, %s30
      %s47 = sphi 0, %s31
      %s53 = sphi 0, %s55
      %s56 = sphi 0, %s53
      %s57 = sphi 0, %s56
      %s73 = sphi 0, %s57
      %s79 = sphi 0, %s81
      %s82 = sphi 0, %s79
      %s83 = sphi 0, %s82
      %s99 = sphi 0, %s83
      %s105 = sphi 0, %s107
      %s108 = sphi 0, %s105
      %s109 = sphi 0, %s108
      %s125 = sphi 0, %s109
      %s129 = sphi 0, %s129
      %s131 = sphi 0, %s129
      %s132 = sphi 0, %s131
      %s146 = sphi 0, %s132
      %s150 = sphi 0, %s150
      %s152 = sphi 0, %s150
      %s153 = sphi 0, %s152
      %s167 = sphi 0, %s153
      %s171 = sphi 0, %s171
      %s173 = sphi 0, %s171
      %s174 = sphi 0, %s173
      %s188 = sphi 0, %s174
      %s192 = sphi 0, %s192
      %s194 = sphi 0, %s192
      %s195 = sphi 0, %s194
      %s209 = sphi 0, %s195
      %s215 = sphi 0, %s217
      %s218 = sphi 0, %s215
      %s219 = sphi 0, %s218
      %s235 = sphi 0, %s219
    $region4: #{tpu_custom_call.1} parent=1 // loop_header_branch
      %20 = sbr.rel (%p18) target = $region8
    $region5: #{tpu_custom_call.1} parent=1 // loop_body
      %s22 = ssub.s32 %s17, 1
      %s23 = ssub.s32 %s17, 2
      %s24 = sadd.s32 %s17, 1
      %s25 = ssub.s32 %s17, %s24
      %p26 = scmp.eq.s32.totalorder %s25, 0
      %s28 = sadd.s32 %s27, 1
      %s29 = scalar_select %p26, %s27, %s28
      %p32 = pneg %p26
      %p33 = scmp.eq.s32.totalorder %s17, 1
      %p34 = por %p32, %p33
      %p35 = scmp.ne.s32.totalorder %s27, %s30
      %p36 = scmp.eq.s32.totalorder %s17, 0
      %p37 = por %p35, %p36
      %p38 = scmp.ne.s32.totalorder %s27, %s30
      %p39 = scmp.eq.s32.totalorder %s22, 1
      %p40 = por %p38, %p39
      %p41 = scmp.ne.s32.totalorder %s30, %s31
      %p42 = scmp.eq.s32.totalorder %s22, 0
      %p43 = por %p41, %p42
      %p44 = scmp.ne.s32.totalorder %s30, %s31
      %p45 = scmp.eq.s32.totalorder %s23, 1
      %p46 = por %p44, %p45
      %p48 = scmp.ne.s32.totalorder %s31, %s47
      %p49 = scmp.eq.s32.totalorder %s23, 0
      %p50 = por %p48, %p49
      %s51 = ssub.s32 %s17, %s24
      %p52 = scmp.eq.s32.totalorder %s51, 0
      %s54 = sadd.s32 %s53, 1
      %s55 = scalar_select %p52, %s53, %s54
      %p58 = pneg %p52
      %p59 = scmp.eq.s32.totalorder %s17, 1
      %p60 = por %p58, %p59
      %p61 = scmp.ne.s32.totalorder %s53, %s56
      %p62 = scmp.eq.s32.totalorder %s17, 0
      %p63 = por %p61, %p62
      %p64 = scmp.ne.s32.totalorder %s53, %s56
      %p65 = scmp.eq.s32.totalorder %s22, 1
      %p66 = por %p64, %p65
      %p67 = scmp.ne.s32.totalorder %s56, %s57
      %p68 = scmp.eq.s32.totalorder %s22, 0
      %p69 = por %p67, %p68
      %p70 = scmp.ne.s32.totalorder %s56, %s57
      %p71 = scmp.eq.s32.totalorder %s23, 1
      %p72 = por %p70, %p71
      %p74 = scmp.ne.s32.totalorder %s57, %s73
      %p75 = scmp.eq.s32.totalorder %s23, 0
      %p76 = por %p74, %p75
      %s77 = ssub.s32 %s17, %s24
      %p78 = scmp.eq.s32.totalorder %s77, 0
      %s80 = sadd.s32 %s79, 1
      %s81 = scalar_select %p78, %s79, %s80
      %p84 = pneg %p78
      %p85 = scmp.eq.s32.totalorder %s17, 1
      %p86 = por %p84, %p85
      %p87 = scmp.ne.s32.totalorder %s79, %s82
      %p88 = scmp.eq.s32.totalorder %s17, 0
      %p89 = por %p87, %p88
      %p90 = scmp.ne.s32.totalorder %s79, %s82
      %p91 = scmp.eq.s32.totalorder %s22, 1
      %p92 = por %p90, %p91
      %p93 = scmp.ne.s32.totalorder %s82, %s83
      %p94 = scmp.eq.s32.totalorder %s22, 0
      %p95 = por %p93, %p94
      %p96 = scmp.ne.s32.totalorder %s82, %s83
      %p97 = scmp.eq.s32.totalorder %s23, 1
      %p98 = por %p96, %p97
      %p100 = scmp.ne.s32.totalorder %s83, %s99
      %p101 = scmp.eq.s32.totalorder %s23, 0
      %p102 = por %p100, %p101
      %s103 = ssub.s32 %s17, %s24
      %p104 = scmp.eq.s32.totalorder %s103, 0
      %s106 = sadd.s32 %s105, 1
      %s107 = scalar_select %p104, %s105, %s106
      %p110 = pneg %p104
      %p111 = scmp.eq.s32.totalorder %s17, 1
      %p112 = por %p110, %p111
      %p113 = scmp.ne.s32.totalorder %s105, %s108
      %p114 = scmp.eq.s32.totalorder %s17, 0
      %p115 = por %p113, %p114
      %p116 = scmp.ne.s32.totalorder %s105, %s108
      %p117 = scmp.eq.s32.totalorder %s22, 1
      %p118 = por %p116, %p117
      %p119 = scmp.ne.s32.totalorder %s108, %s109
      %p120 = scmp.eq.s32.totalorder %s22, 0
      %p121 = por %p119, %p120
      %p122 = scmp.ne.s32.totalorder %s108, %s109
      %p123 = scmp.eq.s32.totalorder %s23, 1
      %p124 = por %p122, %p123
      %p126 = scmp.ne.s32.totalorder %s109, %s125
      %p127 = scmp.eq.s32.totalorder %s23, 0
      %p128 = por %p126, %p127
      %s130 = sadd.s32 %s129, 1
      %p133 = scmp.eq.s32.totalorder %s17, 1
      %p134 = scmp.ne.s32.totalorder %s129, %s131
      %p135 = scmp.eq.s32.totalorder %s17, 0
      %p136 = por %p134, %p135
      %p137 = scmp.ne.s32.totalorder %s129, %s131
      %p138 = scmp.eq.s32.totalorder %s22, 1
      %p139 = por %p137, %p138
      %p140 = scmp.ne.s32.totalorder %s131, %s132
      %p141 = scmp.eq.s32.totalorder %s22, 0
      %p142 = por %p140, %p141
      %p143 = scmp.ne.s32.totalorder %s131, %s132
      %p144 = scmp.eq.s32.totalorder %s23, 1
      %p145 = por %p143, %p144
      %p147 = scmp.ne.s32.totalorder %s132, %s146
      %p148 = scmp.eq.s32.totalorder %s23, 0
      %p149 = por %p147, %p148
      %s151 = sadd.s32 %s150, 1
      %p154 = scmp.eq.s32.totalorder %s17, 1
      %p155 = scmp.ne.s32.totalorder %s150, %s152
      %p156 = scmp.eq.s32.totalorder %s17, 0
      %p157 = por %p155, %p156
      %p158 = scmp.ne.s32.totalorder %s150, %s152
      %p159 = scmp.eq.s32.totalorder %s22, 1
      %p160 = por %p158, %p159
      %p161 = scmp.ne.s32.totalorder %s152, %s153
      %p162 = scmp.eq.s32.totalorder %s22, 0
      %p163 = por %p161, %p162
      %p164 = scmp.ne.s32.totalorder %s152, %s153
      %p165 = scmp.eq.s32.totalorder %s23, 1
      %p166 = por %p164, %p165
      %p168 = scmp.ne.s32.totalorder %s153, %s167
      %p169 = scmp.eq.s32.totalorder %s23, 0
      %p170 = por %p168, %p169
      %s172 = sadd.s32 %s171, 1
      %p175 = scmp.eq.s32.totalorder %s17, 1
      %p176 = scmp.ne.s32.totalorder %s171, %s173
      %p177 = scmp.eq.s32.totalorder %s17, 0
      %p178 = por %p176, %p177
      %p179 = scmp.ne.s32.totalorder %s171, %s173
      %p180 = scmp.eq.s32.totalorder %s22, 1
      %p181 = por %p179, %p180
      %p182 = scmp.ne.s32.totalorder %s173, %s174
      %p183 = scmp.eq.s32.totalorder %s22, 0
      %p184 = por %p182, %p183
      %p185 = scmp.ne.s32.totalorder %s173, %s174
      %p186 = scmp.eq.s32.totalorder %s23, 1
      %p187 = por %p185, %p186
      %p189 = scmp.ne.s32.totalorder %s174, %s188
      %p190 = scmp.eq.s32.totalorder %s23, 0
      %p191 = por %p189, %p190
      %s193 = sadd.s32 %s192, 1
      %p196 = scmp.eq.s32.totalorder %s17, 1
      %p197 = scmp.ne.s32.totalorder %s192, %s194
      %p198 = scmp.eq.s32.totalorder %s17, 0
      %p199 = por %p197, %p198
      %p200 = scmp.ne.s32.totalorder %s192, %s194
      %p201 = scmp.eq.s32.totalorder %s22, 1
      %p202 = por %p200, %p201
      %p203 = scmp.ne.s32.totalorder %s194, %s195
      %p204 = scmp.eq.s32.totalorder %s22, 0
      %p205 = por %p203, %p204
      %p206 = scmp.ne.s32.totalorder %s194, %s195
      %p207 = scmp.eq.s32.totalorder %s23, 1
      %p208 = por %p206, %p207
      %p210 = scmp.ne.s32.totalorder %s195, %s209
      %p211 = scmp.eq.s32.totalorder %s23, 0
      %p212 = por %p210, %p211
      %s213 = ssub.s32 %s17, %s24
      %p214 = scmp.eq.s32.totalorder %s213, 0
      %s216 = sadd.s32 %s215, 1
      %s217 = scalar_select %p214, %s215, %s216
      %p220 = pneg %p214
      %p221 = scmp.eq.s32.totalorder %s17, 1
      %p222 = por %p220, %p221
      %p223 = scmp.ne.s32.totalorder %s215, %s218
      %p224 = scmp.eq.s32.totalorder %s17, 0
      %p225 = por %p223, %p224
      %p226 = scmp.ne.s32.totalorder %s215, %s218
      %p227 = scmp.eq.s32.totalorder %s22, 1
      %p228 = por %p226, %p227
      %p229 = scmp.ne.s32.totalorder %s218, %s219
      %p230 = scmp.eq.s32.totalorder %s22, 0
      %p231 = por %p229, %p230
      %p232 = scmp.ne.s32.totalorder %s218, %s219
      %p233 = scmp.eq.s32.totalorder %s23, 1
      %p234 = por %p232, %p233
      %p236 = scmp.ne.s32.totalorder %s219, %s235
      %p237 = scmp.eq.s32.totalorder %s23, 0
      %p238 = por %p236, %p237
      %p239 = scmp.le.s32.totalorder 1, %s17
      %p240 = scmp.lt.s32.totalorder %s17, 3
      %p241 = pnand %p239, %p240
      %p242 = pneg %p241
      // Predicated region
      $region9: #{tpu_custom_call.1} parent=5 // pred_check
        _
      $region10: #{tpu_custom_call.1} parent=5 // pred_check_branch
        %244 = sbr.rel (%p241) target = $region12
      $region11: #{tpu_custom_call.1} parent=5 // pred_region
        %s245 = ssub.s32 %s17, 1
        // Predicated region
        $region13: #{tpu_custom_call.1} parent=11 // pred_check
          %p246 = pneg %p142
        $region14: #{tpu_custom_call.1} parent=11 // pred_check_branch
          %248 = sbr.rel (%p246) target = $region16
        $region15: #{tpu_custom_call.1} parent=11 // pred_region
          _
        $region16: #{tpu_custom_call.1} parent=11 // pred_fallthru
          _
        // Predicated region
        $region17: #{tpu_custom_call.1} parent=11 // pred_check
          %p249 = pneg %p163
        $region18: #{tpu_custom_call.1} parent=11 // pred_check_branch
          %251 = sbr.rel (%p249) target = $region20
        $region19: #{tpu_custom_call.1} parent=11 // pred_region
          _
        $region20: #{tpu_custom_call.1} parent=11 // pred_fallthru
          _
        // Predicated region
        $region21: #{tpu_custom_call.1} parent=11 // pred_check
          %p252 = pneg %p184
        $region22: #{tpu_custom_call.1} parent=11 // pred_check_branch
          %254 = sbr.rel (%p252) target = $region24
        $region23: #{tpu_custom_call.1} parent=11 // pred_region
          _
        $region24: #{tpu_custom_call.1} parent=11 // pred_fallthru
          _
        // Predicated region
        $region25: #{tpu_custom_call.1} parent=11 // pred_check
          %p255 = pneg %p205
        $region26: #{tpu_custom_call.1} parent=11 // pred_check_branch
          %257 = sbr.rel (%p255) target = $region28
        $region27: #{tpu_custom_call.1} parent=11 // pred_region
          _
        $region28: #{tpu_custom_call.1} parent=11 // pred_fallthru
          _
      $region12: #{tpu_custom_call.1} parent=5 // pred_fallthru
        _
      %p258 = scmp.lt.s32.totalorder %s17, 2
      // Predicated region
      $region29: #{tpu_custom_call.1} parent=5 // pred_check
        %p259 = pneg %p258
      $region30: #{tpu_custom_call.1} parent=5 // pred_check_branch
        %261 = sbr.rel (%p259) target = $region32
      $region31: #{tpu_custom_call.1} parent=5 // pred_region
        // Predicated region
        $region33: #{tpu_custom_call.1} parent=31 // pred_check
          %p262 = pneg %p37
        $region34: #{tpu_custom_call.1} parent=31 // pred_check_branch
          %264 = sbr.rel (%p262) target = $region36
        $region35: #{tpu_custom_call.1} parent=31 // pred_region
          %p265 = scmp.lt.s32.totalorder %s17, 1
          %s266 = scalar_select %p265, %s17, 1
          %s267 = smul.addr %s266, 4
          %s268 = scalar_lea.vmem %s0, %s267
        $region36: #{tpu_custom_call.1} parent=31 // pred_fallthru
          _
        // Predicated region
        $region37: #{tpu_custom_call.1} parent=31 // pred_check
          %p269 = pneg %p63
        $region38: #{tpu_custom_call.1} parent=31 // pred_check_branch
          %271 = sbr.rel (%p269) target = $region40
        $region39: #{tpu_custom_call.1} parent=31 // pred_region
          %p272 = scmp.lt.s32.totalorder %s17, 1
          %s273 = scalar_select %p272, %s17, 1
          %s274 = smul.addr %s273, 2
          %s275 = smul.addr %s274, 4
          %s276 = scalar_lea.vmem %s1, %s275
        $region40: #{tpu_custom_call.1} parent=31 // pred_fallthru
          _
        // Predicated region
        $region41: #{tpu_custom_call.1} parent=31 // pred_check
          %p277 = pneg %p89
        $region42: #{tpu_custom_call.1} parent=31 // pred_check_branch
          %279 = sbr.rel (%p277) target = $region44
        $region43: #{tpu_custom_call.1} parent=31 // pred_region
          %p280 = scmp.lt.s32.totalorder %s17, 1
          %s281 = scalar_select %p280, %s17, 1
          %s282 = smul.addr %s281, 8
          %s283 = scalar_lea.vmem %s2, %s282
        $region44: #{tpu_custom_call.1} parent=31 // pred_fallthru
          _
        // Predicated region
        $region45: #{tpu_custom_call.1} parent=31 // pred_check
          %p284 = pneg %p115
        $region46: #{tpu_custom_call.1} parent=31 // pred_check_branch
          %286 = sbr.rel (%p284) target = $region48
        $region47: #{tpu_custom_call.1} parent=31 // pred_region
          %p287 = scmp.lt.s32.totalorder %s17, 1
          %s288 = scalar_select %p287, %s17, 1
          %s289 = scalar_lea.vmem %s3, %s288
        $region48: #{tpu_custom_call.1} parent=31 // pred_fallthru
          _
      $region32: #{tpu_custom_call.1} parent=5 // pred_fallthru
        _
      %p290 = scmp.le.s32.totalorder 1, %s17
      %p291 = scmp.lt.s32.totalorder %s17, 3
      %p292 = pnand %p290, %p291
      %p293 = pneg %p292
      // Predicated region
      $region49: #{tpu_custom_call.1} parent=5 // pred_check
        _
      $region50: #{tpu_custom_call.1} parent=5 // pred_check_branch
        %295 = sbr.rel (%p292) target = $region52
      $region51: #{tpu_custom_call.1} parent=5 // pred_region
        %s296 = ssub.s32 %s17, 1
        %p297 = scmp.lt.s32.totalorder %s22, 1
        %s298 = scalar_select %p297, %s22, 1
        %s299 = smul.addr %s298, 4
        %s300 = scalar_lea.vmem %s0, %s299
        %p301 = pneg %p43
        %p302 = pneg %p40
        %p303 = scmp.lt.s32.totalorder %s22, 1
        %s304 = scalar_select %p303, %s22, 1
        %s305 = smul.addr %s304, 2
        %s306 = smul.addr %s305, 4
        %s307 = scalar_lea.vmem %s1, %s306
        %p308 = pneg %p69
        %p309 = pneg %p66
        %p310 = scmp.lt.s32.totalorder %s22, 1
        %s311 = scalar_select %p310, %s22, 1
        %s312 = smul.addr %s311, 8
        %s313 = scalar_lea.vmem %s2, %s312
        %p314 = pneg %p95
        %p315 = pneg %p92
        %p316 = scmp.lt.s32.totalorder %s22, 1
        %s317 = scalar_select %p316, %s22, 1
        %s318 = scalar_lea.vmem %s3, %s317
        %p319 = pneg %p121
        %p320 = pneg %p118
        %p321 = pneg %p142
        %p322 = pneg %p139
        %p323 = pneg %p163
        %p324 = pneg %p160
        %p325 = pneg %p184
        %p326 = pneg %p181
        %p327 = pneg %p205
        %p328 = pneg %p202
        %p329 = pneg %p231
        %p330 = pneg %p228
        %s331 = sand.u32 %s218, 1
        %s332 = scalar_lea.sflag [#allocation4], %s331
        %s333 = sand.u32 %s218, 1
        %s334 = smul.addr %s333, 8
        %s335 = scalar_lea.vmem [#allocation3], %s334
        %p336 = scmp.lt.s32.totalorder %s22, 1
        %s337 = scalar_select %p336, %s22, 1
        %s338 = smul.addr %s337, 4
        %s339 = scalar_lea.vmem %s0, %s338
        %p340 = scmp.lt.s32.totalorder %s22, 1
        %s341 = scalar_select %p340, %s22, 1
        %s342 = smul.addr %s341, 2
        %s343 = smul.addr %s342, 4
        %s344 = scalar_lea.vmem %s1, %s343
        %p345 = scmp.lt.s32.totalorder %s22, 1
        %s346 = scalar_select %p345, %s22, 1
        %s347 = smul.addr %s346, 8
        %s348 = scalar_lea.vmem %s2, %s347
        %p349 = scmp.lt.s32.totalorder %s22, 1
        %s350 = scalar_select %p349, %s22, 1
        %s351 = scalar_lea.vmem %s3, %s350
        %v353 = vld [vmem:[%s339] sm:$0xf]
        %v354 = vld [vmem:[%s344] sm:$0xf]
        %v355 = vld [vmem:[%s344 + $0x4] sm:$0xf]
        %v356 = vld [vmem:[%s348] sm:$0xff]
        %vm357 = vcmp.ne.s32.totalorder %v356, 0
        %v358 = vld [vmem:[%s351] sm:$0x1]
        %vm359 = vcmp.ne.s32.totalorder %v358, 0
        %v360 = vsel %vm357, 1, 0
        %361 = vset.pattern.permute.xlu0 0
        %362 = vperm.xlu0 %361, %v360
        %v363 = vpop.permute.xlu0 %362
        %vm364 = vcmp.eq.s32.totalorder %v363, 1
        %v365 = vsel %vm359, 1, 0
        %v366 = vperm.slane %v365, 0
        %vm367 = vcmp.eq.s32.totalorder %v366, 1
        %vm368 = vmand %vm364, %vm367
        %v369 = vld [vmem:[%s4] sm:$0xf]
        %v370 = vld [vmem:[%s4 + $0x4] sm:$0xf]
        %v371 = vld [vmem:[%s4 + $0x8] sm:$0xf]
        %v372 = vld [vmem:[%s4 + $0xc] sm:$0xf]
        %v377 = vunpack.c.l.b16 %v369
        %v378 = vunpack.c.l.b16 %v370
        %v379 = vunpack.c.l.b16 %v371
        %v380 = vunpack.c.l.b16 %v372
        %v381 = vpack.c.b16 %v378, %v377
        %v382 = vpack.c.b16 %v380, %v379
        %vm385 = vcmask 261120
        %v387 = vsel %vm385, %v353, 0
        %389 = vmatpush.bf16.msra.mxu0 0
        %390 = vmatpush.bf16.msra.mxu0 0
        %391 = vmatpush.bf16.msra.mxu0 0
        %392 = vmatpush.bf16.msra.mxu0 0
        %393 = vmatpush.bf16.msra.mxu0 0
        %394 = vmatpush.bf16.msra.mxu0 0
        %395 = vmatpush.bf16.msra.mxu0 %v382
        %396 = vmatpush.bf16.msra.mxu0 %v381
        %397 = vmatmul.bf16.gmra.mxu0 %v387
        %v398 = vpop.f32.mrf.mxu0
        %v399 = vadd.f32 0.0, %v398
        %v400 = vpop.f32.mrf.mxu0
        %401 = vdwg.mxu0
        %v402 = vmul.f32 %v399, 0.35355338
        %v403 = vld [vmem:[%s5] sm:$0xf]
        %v404 = vld [vmem:[%s5 + $0x4] sm:$0xf]
        %v405 = vld [vmem:[%s5 + $0x8] sm:$0xf]
        %v406 = vld [vmem:[%s5 + $0xc] sm:$0xf]
        %v407 = vld [vmem:[%s5 + $0x10] sm:$0xf]
        %v408 = vld [vmem:[%s5 + $0x14] sm:$0xf]
        %v411 = vunpack.c.l.b16 %v354
        %v412 = vunpack.c.l.b16 %v355
        %v413 = vpack.c.b16 %v412, %v411
        %v420 = vunpack.c.l.b16 %v403
        %v421 = vunpack.c.l.b16 %v404
        %v422 = vunpack.c.l.b16 %v405
        %v423 = vunpack.c.l.b16 %v406
        %v424 = vunpack.c.l.b16 %v407
        %v425 = vunpack.c.l.b16 %v408
        %v426 = vpack.c.b16 %v421, %v420
        %v427 = vpack.c.b16 %v423, %v422
        %v428 = vpack.c.b16 %v425, %v424
        %vm432 = vcmask 392192
        %v434 = vsel %vm432, %v413, 0
        %436 = vmatpush.bf16.msra.mxu0 0
        %437 = vmatpush.bf16.msra.mxu0 0
        %438 = vmatpush.bf16.msra.mxu0 0
        %439 = vmatpush.bf16.msra.mxu0 0
        %440 = vmatpush.bf16.msra.mxu0 0
        %441 = vmatpush.bf16.msra.mxu0 %v428
        %442 = vmatpush.bf16.msra.mxu0 %v427
        %443 = vmatpush.bf16.msra.mxu0 %v426
        %444 = vmatmul.bf16.gmra.mxu0 %v434
        %v445 = vpop.f32.mrf.mxu0
        %v446 = vadd.f32 0.0, %v445
        %v447 = vpop.f32.mrf.mxu0
        %v448 = vadd.f32 0.0, %v447
        %449 = vdwg.mxu0
        %v450 = vld [vmem:[%s6] sm:$0xf]
        %v451 = vld [vmem:[%s6 + $0x4] sm:$0xf]
        %v452 = vld [vmem:[%s6 + $0x8] sm:$0xf]
        %v453 = vld [vmem:[%s6 + $0xc] sm:$0xf]
        %v454 = vld [vmem:[%s6 + $0x10] sm:$0xf]
        %v455 = vld [vmem:[%s6 + $0x14] sm:$0xf]
        %v462 = vunpack.c.l.b16 %v450
        %v463 = vunpack.c.l.b16 %v451
        %v464 = vunpack.c.l.b16 %v452
        %v465 = vunpack.c.l.b16 %v453
        %v466 = vunpack.c.l.b16 %v454
        %v467 = vunpack.c.l.b16 %v455
        %v468 = vpack.c.b16 %v463, %v462
        %v469 = vpack.c.b16 %v465, %v464
        %v470 = vpack.c.b16 %v467, %v466
        %474 = vmatpush.bf16.msra.mxu0 0
        %475 = vmatpush.bf16.msra.mxu0 0
        %476 = vmatpush.bf16.msra.mxu0 0
        %477 = vmatpush.bf16.msra.mxu0 0
        %478 = vmatpush.bf16.msra.mxu0 0
        %479 = vmatpush.bf16.msra.mxu0 %v470
        %480 = vmatpush.bf16.msra.mxu0 %v469
        %481 = vmatpush.bf16.msra.mxu0 %v468
        %482 = vmatmul.bf16.gmra.mxu0 %v434
        %v483 = vpop.f32.mrf.mxu0
        %v484 = vadd.f32 0.0, %v483
        %v485 = vpop.f32.mrf.mxu0
        %v486 = vadd.f32 0.0, %v485
        %487 = vdwg.mxu0
        %v488 = vpack.c.bf16 %v402, %v402
        %v489 = vpack.c.bf16 %v448, %v446
        %vm490 = vcmask 64512
        %v492 = vsel %vm490, %v488, 0
        %v495 = vsel %vm490, %v489, 0
        %497 = vmatpush.bf16.xpose.msra.mxu0 0
        %498 = vmatpush.bf16.xpose.msra.mxu0 0
        %499 = vmatpush.bf16.xpose.msra.mxu0 0
        %500 = vmatpush.bf16.xpose.msra.mxu0 0
        %501 = vmatpush.bf16.xpose.msra.mxu0 0
        %502 = vmatpush.bf16.xpose.msra.mxu0 0
        %503 = vmatpush.bf16.xpose.msra.mxu0 0
        %504 = vmatpush.bf16.xpose.msra.mxu0 %v495
        %505 = vmatmul.bf16.gmra.mxu0 %v492
        %v506 = vpop.f32.mrf.mxu0
        %v507 = vadd.f32 0.0, %v506
        %v508 = vpop.f32.mrf.mxu0
        %509 = vdwg.mxu0
        %v510 = vsel %vm368, %v507, -3.4028235e+38
        %vm511 = vcmask 130048
        %v512 = vsel %vm511, %v510, -inf
        %513 = vmax.xlane.f32.xlu0 %v512
        %v514 = vpop.xlane.xlu0 %513
        %v515 = vsub.f32 %v510, %v514
        %v516 = vmul.f32 %v515, 1.442695
        %v517 = vpow.pop %v516
        %v518 = vsel %vm511, %v517, 0.0
        %519 = vadd.xlane.f32.xlu0 %v518
        %v520 = vpop.xlane.xlu0 %519
        %v521 = vrcp.pop %v520
        %v522 = vmul.f32 %v517, %v521
        %v523 = vpack.c.bf16 %v522, %v522
        %v524 = vpack.c.bf16 %v486, %v484
        %v526 = vsel %vm511, %v523, 0
        %528 = vmatpush.bf16.msra.mxu0 0
        %529 = vmatpush.bf16.msra.mxu0 0
        %530 = vmatpush.bf16.msra.mxu0 0
        %531 = vmatpush.bf16.msra.mxu0 0
        %532 = vmatpush.bf16.msra.mxu0 0
        %533 = vmatpush.bf16.msra.mxu0 0
        %534 = vmatpush.bf16.msra.mxu0 0
        %535 = vmatpush.bf16.msra.mxu0 %v524
        %536 = vmatmul.bf16.gmra.mxu0 %v526
        %v537 = vpop.f32.mrf.mxu0
        %v538 = vadd.f32 0.0, %v537
        %v539 = vpop.f32.mrf.mxu0
        %540 = vdwg.mxu0
        %541 = vst.msk [vmem:[#allocation2] sm:$0xff] %vm490, %v538
        %s542 = scalar_lea.vmem %s4, 16
        %v543 = vld [vmem:[%s542] sm:$0xf]
        %v544 = vld [vmem:[%s542 + $0x4] sm:$0xf]
        %v545 = vld [vmem:[%s542 + $0x8] sm:$0xf]
        %v546 = vld [vmem:[%s542 + $0xc] sm:$0xf]
        %v551 = vunpack.c.l.b16 %v543
        %v552 = vunpack.c.l.b16 %v544
        %v553 = vunpack.c.l.b16 %v545
        %v554 = vunpack.c.l.b16 %v546
        %v555 = vpack.c.b16 %v552, %v551
        %v556 = vpack.c.b16 %v554, %v553
        %559 = vmatpush.bf16.msra.mxu0 0
        %560 = vmatpush.bf16.msra.mxu0 0
        %561 = vmatpush.bf16.msra.mxu0 0
        %562 = vmatpush.bf16.msra.mxu0 0
        %563 = vmatpush.bf16.msra.mxu0 0
        %564 = vmatpush.bf16.msra.mxu0 0
        %565 = vmatpush.bf16.msra.mxu0 %v556
        %566 = vmatpush.bf16.msra.mxu0 %v555
        %567 = vmatmul.bf16.gmra.mxu0 %v387
        %v568 = vpop.f32.mrf.mxu0
        %v569 = vadd.f32 0.0, %v568
        %v570 = vpop.f32.mrf.mxu0
        %571 = vdwg.mxu0
        %v572 = vmul.f32 %v569, 0.35355338
        %s573 = scalar_lea.vmem %s5, 24
        %v574 = vld [vmem:[%s573] sm:$0xf]
        %v575 = vld [vmem:[%s573 + $0x4] sm:$0xf]
        %v576 = vld [vmem:[%s573 + $0x8] sm:$0xf]
        %v577 = vld [vmem:[%s573 + $0xc] sm:$0xf]
        %v578 = vld [vmem:[%s573 + $0x10] sm:$0xf]
        %v579 = vld [vmem:[%s573 + $0x14] sm:$0xf]
        %v586 = vunpack.c.l.b16 %v574
        %v587 = vunpack.c.l.b16 %v575
        %v588 = vunpack.c.l.b16 %v576
        %v589 = vunpack.c.l.b16 %v577
        %v590 = vunpack.c.l.b16 %v578
        %v591 = vunpack.c.l.b16 %v579
        %v592 = vpack.c.b16 %v587, %v586
        %v593 = vpack.c.b16 %v589, %v588
        %v594 = vpack.c.b16 %v591, %v590
        %598 = vmatpush.bf16.msra.mxu0 0
        %599 = vmatpush.bf16.msra.mxu0 0
        %600 = vmatpush.bf16.msra.mxu0 0
        %601 = vmatpush.bf16.msra.mxu0 0
        %602 = vmatpush.bf16.msra.mxu0 0
        %603 = vmatpush.bf16.msra.mxu0 %v594
        %604 = vmatpush.bf16.msra.mxu0 %v593
        %605 = vmatpush.bf16.msra.mxu0 %v592
        %606 = vmatmul.bf16.gmra.mxu0 %v434
        %v607 = vpop.f32.mrf.mxu0
        %v608 = vadd.f32 0.0, %v607
        %v609 = vpop.f32.mrf.mxu0
        %v610 = vadd.f32 0.0, %v609
        %611 = vdwg.mxu0
        %s612 = scalar_lea.vmem %s6, 24
        %v613 = vld [vmem:[%s612] sm:$0xf]
        %v614 = vld [vmem:[%s612 + $0x4] sm:$0xf]
        %v615 = vld [vmem:[%s612 + $0x8] sm:$0xf]
        %v616 = vld [vmem:[%s612 + $0xc] sm:$0xf]
        %v617 = vld [vmem:[%s612 + $0x10] sm:$0xf]
        %v618 = vld [vmem:[%s612 + $0x14] sm:$0xf]
        %v625 = vunpack.c.l.b16 %v613
        %v626 = vunpack.c.l.b16 %v614
        %v627 = vunpack.c.l.b16 %v615
        %v628 = vunpack.c.l.b16 %v616
        %v629 = vunpack.c.l.b16 %v617
        %v630 = vunpack.c.l.b16 %v618
        %v631 = vpack.c.b16 %v626, %v625
        %v632 = vpack.c.b16 %v628, %v627
        %v633 = vpack.c.b16 %v630, %v629
        %637 = vmatpush.bf16.msra.mxu0 0
        %638 = vmatpush.bf16.msra.mxu0 0
        %639 = vmatpush.bf16.msra.mxu0 0
        %640 = vmatpush.bf16.msra.mxu0 0
        %641 = vmatpush.bf16.msra.mxu0 0
        %642 = vmatpush.bf16.msra.mxu0 %v633
        %643 = vmatpush.bf16.msra.mxu0 %v632
        %644 = vmatpush.bf16.msra.mxu0 %v631
        %645 = vmatmul.bf16.gmra.mxu0 %v434
        %v646 = vpop.f32.mrf.mxu0
        %v647 = vadd.f32 0.0, %v646
        %v648 = vpop.f32.mrf.mxu0
        %v649 = vadd.f32 0.0, %v648
        %650 = vdwg.mxu0
        %v651 = vpack.c.bf16 %v572, %v572
        %v652 = vpack.c.bf16 %v610, %v608
        %v654 = vsel %vm490, %v651, 0
        %v657 = vsel %vm490, %v652, 0
        %659 = vmatpush.bf16.xpose.msra.mxu0 0
        %660 = vmatpush.bf16.xpose.msra.mxu0 0
        %661 = vmatpush.bf16.xpose.msra.mxu0 0
        %662 = vmatpush.bf16.xpose.msra.mxu0 0
        %663 = vmatpush.bf16.xpose.msra.mxu0 0
        %664 = vmatpush.bf16.xpose.msra.mxu0 0
        %665 = vmatpush.bf16.xpose.msra.mxu0 0
        %666 = vmatpush.bf16.xpose.msra.mxu0 %v657
        %667 = vmatmul.bf16.gmra.mxu0 %v654
        %v668 = vpop.f32.mrf.mxu0
        %v669 = vadd.f32 0.0, %v668
        %v670 = vpop.f32.mrf.mxu0
        %671 = vdwg.mxu0
        %v672 = vsel %vm368, %v669, -3.4028235e+38
        %v673 = vsel %vm511, %v672, -inf
        %674 = vmax.xlane.f32.xlu0 %v673
        %v675 = vpop.xlane.xlu0 %674
        %v676 = vsub.f32 %v672, %v675
        %v677 = vmul.f32 %v676, 1.442695
        %v678 = vpow.pop %v677
        %v679 = vsel %vm511, %v678, 0.0
        %680 = vadd.xlane.f32.xlu0 %v679
        %v681 = vpop.xlane.xlu0 %680
        %v682 = vrcp.pop %v681
        %v683 = vmul.f32 %v678, %v682
        %v684 = vpack.c.bf16 %v683, %v683
        %v685 = vpack.c.bf16 %v649, %v647
        %v687 = vsel %vm511, %v684, 0
        %689 = vmatpush.bf16.msra.mxu0 0
        %690 = vmatpush.bf16.msra.mxu0 0
        %691 = vmatpush.bf16.msra.mxu0 0
        %692 = vmatpush.bf16.msra.mxu0 0
        %693 = vmatpush.bf16.msra.mxu0 0
        %694 = vmatpush.bf16.msra.mxu0 0
        %695 = vmatpush.bf16.msra.mxu0 0
        %696 = vmatpush.bf16.msra.mxu0 %v685
        %697 = vmatmul.bf16.gmra.mxu0 %v687
        %v698 = vpop.f32.mrf.mxu0
        %v699 = vadd.f32 0.0, %v698
        %v700 = vpop.f32.mrf.mxu0
        %701 = vdwg.mxu0
        %703 = vrot.lane.b32.xlu0 %v699, 8
        %v704 = vpop.permute.xlu0 %703
        %vm706 = vcmask 130112
        %707 = vst.msk [vmem:[#allocation2] sm:$0xff] %vm706, %v704
        %s708 = scalar_lea.vmem %s4, 32
        %v709 = vld [vmem:[%s708] sm:$0xf]
        %v710 = vld [vmem:[%s708 + $0x4] sm:$0xf]
        %v711 = vld [vmem:[%s708 + $0x8] sm:$0xf]
        %v712 = vld [vmem:[%s708 + $0xc] sm:$0xf]
        %v717 = vunpack.c.l.b16 %v709
        %v718 = vunpack.c.l.b16 %v710
        %v719 = vunpack.c.l.b16 %v711
        %v720 = vunpack.c.l.b16 %v712
        %v721 = vpack.c.b16 %v718, %v717
        %v722 = vpack.c.b16 %v720, %v719
        %725 = vmatpush.bf16.msra.mxu0 0
        %726 = vmatpush.bf16.msra.mxu0 0
        %727 = vmatpush.bf16.msra.mxu0 0
        %728 = vmatpush.bf16.msra.mxu0 0
        %729 = vmatpush.bf16.msra.mxu0 0
        %730 = vmatpush.bf16.msra.mxu0 0
        %731 = vmatpush.bf16.msra.mxu0 %v722
        %732 = vmatpush.bf16.msra.mxu0 %v721
        %733 = vmatmul.bf16.gmra.mxu0 %v387
        %v734 = vpop.f32.mrf.mxu0
        %v735 = vadd.f32 0.0, %v734
        %v736 = vpop.f32.mrf.mxu0
        %737 = vdwg.mxu0
        %v738 = vmul.f32 %v735, 0.35355338
        %s739 = scalar_lea.vmem %s5, 48
        %v740 = vld [vmem:[%s739] sm:$0xf]
        %v741 = vld [vmem:[%s739 + $0x4] sm:$0xf]
        %v742 = vld [vmem:[%s739 + $0x8] sm:$0xf]
        %v743 = vld [vmem:[%s739 + $0xc] sm:$0xf]
        %v744 = vld [vmem:[%s739 + $0x10] sm:$0xf]
        %v745 = vld [vmem:[%s739 + $0x14] sm:$0xf]
        %v752 = vunpack.c.l.b16 %v740
        %v753 = vunpack.c.l.b16 %v741
        %v754 = vunpack.c.l.b16 %v742
        %v755 = vunpack.c.l.b16 %v743
        %v756 = vunpack.c.l.b16 %v744
        %v757 = vunpack.c.l.b16 %v745
        %v758 = vpack.c.b16 %v753, %v752
        %v759 = vpack.c.b16 %v755, %v754
        %v760 = vpack.c.b16 %v757, %v756
        %764 = vmatpush.bf16.msra.mxu0 0
        %765 = vmatpush.bf16.msra.mxu0 0
        %766 = vmatpush.bf16.msra.mxu0 0
        %767 = vmatpush.bf16.msra.mxu0 0
        %768 = vmatpush.bf16.msra.mxu0 0
        %769 = vmatpush.bf16.msra.mxu0 %v760
        %770 = vmatpush.bf16.msra.mxu0 %v759
        %771 = vmatpush.bf16.msra.mxu0 %v758
        %772 = vmatmul.bf16.gmra.mxu0 %v434
        %v773 = vpop.f32.mrf.mxu0
        %v774 = vadd.f32 0.0, %v773
        %v775 = vpop.f32.mrf.mxu0
        %v776 = vadd.f32 0.0, %v775
        %777 = vdwg.mxu0
        %s778 = scalar_lea.vmem %s6, 48
        %v779 = vld [vmem:[%s778] sm:$0xf]
        %v780 = vld [vmem:[%s778 + $0x4] sm:$0xf]
        %v781 = vld [vmem:[%s778 + $0x8] sm:$0xf]
        %v782 = vld [vmem:[%s778 + $0xc] sm:$0xf]
        %v783 = vld [vmem:[%s778 + $0x10] sm:$0xf]
        %v784 = vld [vmem:[%s778 + $0x14] sm:$0xf]
        %v791 = vunpack.c.l.b16 %v779
        %v792 = vunpack.c.l.b16 %v780
        %v793 = vunpack.c.l.b16 %v781
        %v794 = vunpack.c.l.b16 %v782
        %v795 = vunpack.c.l.b16 %v783
        %v796 = vunpack.c.l.b16 %v784
        %v797 = vpack.c.b16 %v792, %v791
        %v798 = vpack.c.b16 %v794, %v793
        %v799 = vpack.c.b16 %v796, %v795
        %803 = vmatpush.bf16.msra.mxu0 0
        %804 = vmatpush.bf16.msra.mxu0 0
        %805 = vmatpush.bf16.msra.mxu0 0
        %806 = vmatpush.bf16.msra.mxu0 0
        %807 = vmatpush.bf16.msra.mxu0 0
        %808 = vmatpush.bf16.msra.mxu0 %v799
        %809 = vmatpush.bf16.msra.mxu0 %v798
        %810 = vmatpush.bf16.msra.mxu0 %v797
        %811 = vmatmul.bf16.gmra.mxu0 %v434
        %v812 = vpop.f32.mrf.mxu0
        %v813 = vadd.f32 0.0, %v812
        %v814 = vpop.f32.mrf.mxu0
        %v815 = vadd.f32 0.0, %v814
        %816 = vdwg.mxu0
        %v817 = vpack.c.bf16 %v738, %v738
        %v818 = vpack.c.bf16 %v776, %v774
        %v820 = vsel %vm490, %v817, 0
        %v823 = vsel %vm490, %v818, 0
        %825 = vmatpush.bf16.xpose.msra.mxu0 0
        %826 = vmatpush.bf16.xpose.msra.mxu0 0
        %827 = vmatpush.bf16.xpose.msra.mxu0 0
        %828 = vmatpush.bf16.xpose.msra.mxu0 0
        %829 = vmatpush.bf16.xpose.msra.mxu0 0
        %830 = vmatpush.bf16.xpose.msra.mxu0 0
        %831 = vmatpush.bf16.xpose.msra.mxu0 0
        %832 = vmatpush.bf16.xpose.msra.mxu0 %v823
        %833 = vmatmul.bf16.gmra.mxu0 %v820
        %v834 = vpop.f32.mrf.mxu0
        %v835 = vadd.f32 0.0, %v834
        %v836 = vpop.f32.mrf.mxu0
        %837 = vdwg.mxu0
        %v838 = vsel %vm368, %v835, -3.4028235e+38
        %v839 = vsel %vm511, %v838, -inf
        %840 = vmax.xlane.f32.xlu0 %v839
        %v841 = vpop.xlane.xlu0 %840
        %v842 = vsub.f32 %v838, %v841
        %v843 = vmul.f32 %v842, 1.442695
        %v844 = vpow.pop %v843
        %v845 = vsel %vm511, %v844, 0.0
        %846 = vadd.xlane.f32.xlu0 %v845
        %v847 = vpop.xlane.xlu0 %846
        %v848 = vrcp.pop %v847
        %v849 = vmul.f32 %v844, %v848
        %v850 = vpack.c.bf16 %v849, %v849
        %v851 = vpack.c.bf16 %v815, %v813
        %v853 = vsel %vm511, %v850, 0
        %855 = vmatpush.bf16.msra.mxu0 0
        %856 = vmatpush.bf16.msra.mxu0 0
        %857 = vmatpush.bf16.msra.mxu0 0
        %858 = vmatpush.bf16.msra.mxu0 0
        %859 = vmatpush.bf16.msra.mxu0 0
        %860 = vmatpush.bf16.msra.mxu0 0
        %861 = vmatpush.bf16.msra.mxu0 0
        %862 = vmatpush.bf16.msra.mxu0 %v851
        %863 = vmatmul.bf16.gmra.mxu0 %v853
        %v864 = vpop.f32.mrf.mxu0
        %v865 = vadd.f32 0.0, %v864
        %v866 = vpop.f32.mrf.mxu0
        %867 = vdwg.mxu0
        %869 = vrot.lane.b32.xlu0 %v865, 16
        %v870 = vpop.permute.xlu0 %869
        %vm872 = vcmask 195712
        %873 = vst.msk [vmem:[#allocation2] sm:$0xff] %vm872, %v870
        %s874 = scalar_lea.vmem %s4, 48
        %v875 = vld [vmem:[%s874] sm:$0xf]
        %v876 = vld [vmem:[%s874 + $0x4] sm:$0xf]
        %v877 = vld [vmem:[%s874 + $0x8] sm:$0xf]
        %v878 = vld [vmem:[%s874 + $0xc] sm:$0xf]
        %v883 = vunpack.c.l.b16 %v875
        %v884 = vunpack.c.l.b16 %v876
        %v885 = vunpack.c.l.b16 %v877
        %v886 = vunpack.c.l.b16 %v878
        %v887 = vpack.c.b16 %v884, %v883
        %v888 = vpack.c.b16 %v886, %v885
        %891 = vmatpush.bf16.msra.mxu0 0
        %892 = vmatpush.bf16.msra.mxu0 0
        %893 = vmatpush.bf16.msra.mxu0 0
        %894 = vmatpush.bf16.msra.mxu0 0
        %895 = vmatpush.bf16.msra.mxu0 0
        %896 = vmatpush.bf16.msra.mxu0 0
        %897 = vmatpush.bf16.msra.mxu0 %v888
        %898 = vmatpush.bf16.msra.mxu0 %v887
        %899 = vmatmul.bf16.gmra.mxu0 %v387
        %v900 = vpop.f32.mrf.mxu0
        %v901 = vadd.f32 0.0, %v900
        %v902 = vpop.f32.mrf.mxu0
        %903 = vdwg.mxu0
        %v904 = vmul.f32 %v901, 0.35355338
        %s905 = scalar_lea.vmem %s5, 72
        %v906 = vld [vmem:[%s905] sm:$0xf]
        %v907 = vld [vmem:[%s905 + $0x4] sm:$0xf]
        %v908 = vld [vmem:[%s905 + $0x8] sm:$0xf]
        %v909 = vld [vmem:[%s905 + $0xc] sm:$0xf]
        %v910 = vld [vmem:[%s905 + $0x10] sm:$0xf]
        %v911 = vld [vmem:[%s905 + $0x14] sm:$0xf]
        %v918 = vunpack.c.l.b16 %v906
        %v919 = vunpack.c.l.b16 %v907
        %v920 = vunpack.c.l.b16 %v908
        %v921 = vunpack.c.l.b16 %v909
        %v922 = vunpack.c.l.b16 %v910
        %v923 = vunpack.c.l.b16 %v911
        %v924 = vpack.c.b16 %v919, %v918
        %v925 = vpack.c.b16 %v921, %v920
        %v926 = vpack.c.b16 %v923, %v922
        %930 = vmatpush.bf16.msra.mxu0 0
        %931 = vmatpush.bf16.msra.mxu0 0
        %932 = vmatpush.bf16.msra.mxu0 0
        %933 = vmatpush.bf16.msra.mxu0 0
        %934 = vmatpush.bf16.msra.mxu0 0
        %935 = vmatpush.bf16.msra.mxu0 %v926
        %936 = vmatpush.bf16.msra.mxu0 %v925
        %937 = vmatpush.bf16.msra.mxu0 %v924
        %938 = vmatmul.bf16.gmra.mxu0 %v434
        %v939 = vpop.f32.mrf.mxu0
        %v940 = vadd.f32 0.0, %v939
        %v941 = vpop.f32.mrf.mxu0
        %v942 = vadd.f32 0.0, %v941
        %943 = vdwg.mxu0
        %s944 = scalar_lea.vmem %s6, 72
        %v945 = vld [vmem:[%s944] sm:$0xf]
        %v946 = vld [vmem:[%s944 + $0x4] sm:$0xf]
        %v947 = vld [vmem:[%s944 + $0x8] sm:$0xf]
        %v948 = vld [vmem:[%s944 + $0xc] sm:$0xf]
        %v949 = vld [vmem:[%s944 + $0x10] sm:$0xf]
        %v950 = vld [vmem:[%s944 + $0x14] sm:$0xf]
        %v957 = vunpack.c.l.b16 %v945
        %v958 = vunpack.c.l.b16 %v946
        %v959 = vunpack.c.l.b16 %v947
        %v960 = vunpack.c.l.b16 %v948
        %v961 = vunpack.c.l.b16 %v949
        %v962 = vunpack.c.l.b16 %v950
        %v963 = vpack.c.b16 %v958, %v957
        %v964 = vpack.c.b16 %v960, %v959
        %v965 = vpack.c.b16 %v962, %v961
        %969 = vmatpush.bf16.msra.mxu0 0
        %970 = vmatpush.bf16.msra.mxu0 0
        %971 = vmatpush.bf16.msra.mxu0 0
        %972 = vmatpush.bf16.msra.mxu0 0
        %973 = vmatpush.bf16.msra.mxu0 0
        %974 = vmatpush.bf16.msra.mxu0 %v965
        %975 = vmatpush.bf16.msra.mxu0 %v964
        %976 = vmatpush.bf16.msra.mxu0 %v963
        %977 = vmatmul.bf16.gmra.mxu0 %v434
        %v978 = vpop.f32.mrf.mxu0
        %v979 = vadd.f32 0.0, %v978
        %v980 = vpop.f32.mrf.mxu0
        %v981 = vadd.f32 0.0, %v980
        %982 = vdwg.mxu0
        %v983 = vpack.c.bf16 %v904, %v904
        %v984 = vpack.c.bf16 %v942, %v940
        %v986 = vsel %vm490, %v983, 0
        %v989 = vsel %vm490, %v984, 0
        %991 = vmatpush.bf16.xpose.msra.mxu0 0
        %992 = vmatpush.bf16.xpose.msra.mxu0 0
        %993 = vmatpush.bf16.xpose.msra.mxu0 0
        %994 = vmatpush.bf16.xpose.msra.mxu0 0
        %995 = vmatpush.bf16.xpose.msra.mxu0 0
        %996 = vmatpush.bf16.xpose.msra.mxu0 0
        %997 = vmatpush.bf16.xpose.msra.mxu0 0
        %998 = vmatpush.bf16.xpose.msra.mxu0 %v989
        %999 = vmatmul.bf16.gmra.mxu0 %v986
        %v1000 = vpop.f32.mrf.mxu0
        %v1001 = vadd.f32 0.0, %v1000
        %v1002 = vpop.f32.mrf.mxu0
        %1003 = vdwg.mxu0
        %v1004 = vsel %vm368, %v1001, -3.4028235e+38
        %v1005 = vsel %vm511, %v1004, -inf
        %1006 = vmax.xlane.f32.xlu0 %v1005
        %v1007 = vpop.xlane.xlu0 %1006
        %v1008 = vsub.f32 %v1004, %v1007
        %v1009 = vmul.f32 %v1008, 1.442695
        %v1010 = vpow.pop %v1009
        %v1011 = vsel %vm511, %v1010, 0.0
        %1012 = vadd.xlane.f32.xlu0 %v1011
        %v1013 = vpop.xlane.xlu0 %1012
        %v1014 = vrcp.pop %v1013
        %v1015 = vmul.f32 %v1010, %v1014
        %v1016 = vpack.c.bf16 %v1015, %v1015
        %v1017 = vpack.c.bf16 %v981, %v979
        %v1019 = vsel %vm511, %v1016, 0
        %1021 = vmatpush.bf16.msra.mxu0 0
        %1022 = vmatpush.bf16.msra.mxu0 0
        %1023 = vmatpush.bf16.msra.mxu0 0
        %1024 = vmatpush.bf16.msra.mxu0 0
        %1025 = vmatpush.bf16.msra.mxu0 0
        %1026 = vmatpush.bf16.msra.mxu0 0
        %1027 = vmatpush.bf16.msra.mxu0 0
        %1028 = vmatpush.bf16.msra.mxu0 %v1017
        %1029 = vmatmul.bf16.gmra.mxu0 %v1019
        %v1030 = vpop.f32.mrf.mxu0
        %v1031 = vadd.f32 0.0, %v1030
        %v1032 = vpop.f32.mrf.mxu0
        %1033 = vdwg.mxu0
        %1035 = vrot.lane.b32.xlu0 %v1031, 24
        %v1036 = vpop.permute.xlu0 %1035
        %vm1038 = vcmask 261312
        %1039 = vst.msk [vmem:[#allocation2] sm:$0xff] %vm1038, %v1036
        %v1040 = vld [vmem:[#allocation2] sm:$0xff]
        %v1041 = vpack.c.bf16 %v1040, %v1040
        %v1042 = vld [vmem:[%s7] sm:$0xf]
        %v1043 = vld [vmem:[%s7 + $0x4] sm:$0xf]
        %v1044 = vld [vmem:[%s7 + $0x8] sm:$0xf]
        %v1045 = vld [vmem:[%s7 + $0xc] sm:$0xf]
        %v1050 = vunpack.c.l.b16 %v1042
        %v1051 = vunpack.c.l.b16 %v1043
        %v1052 = vunpack.c.l.b16 %v1044
        %v1053 = vunpack.c.l.b16 %v1045
        %v1054 = vpack.c.b16 %v1051, %v1050
        %v1055 = vpack.c.b16 %v1053, %v1052
        %v1059 = vsel %vm385, %v1041, 0
        %1061 = vmatpush.bf16.msra.mxu0 0
        %1062 = vmatpush.bf16.msra.mxu0 0
        %1063 = vmatpush.bf16.msra.mxu0 0
        %1064 = vmatpush.bf16.msra.mxu0 0
        %1065 = vmatpush.bf16.msra.mxu0 0
        %1066 = vmatpush.bf16.msra.mxu0 0
        %1067 = vmatpush.bf16.msra.mxu0 %v1055
        %1068 = vmatpush.bf16.msra.mxu0 %v1054
        %1069 = vmatmul.bf16.gmra.mxu0 %v1059
        %v1070 = vpop.f32.mrf.mxu0
        %v1071 = vadd.f32 0.0, %v1070
        %v1072 = vpop.f32.mrf.mxu0
        %1073 = vdwg.mxu0
        %1074 = vst.msk [vmem:[%s335] sm:$0xff] %vm385, %v1071
        %s1075 = sand.u32 %s218, 1
        %s1076 = scalar_lea.sflag [#allocation4], %s1075
        %s1077 = sand.u32 %s218, 1
        %s1078 = smul.addr %s1077, 8
        %s1079 = scalar_lea.vmem [#allocation3], %s1078
        // Predicated region
        $region53: #{tpu_custom_call.1} parent=51 // pred_check
          %p1080 = pneg %p228
        $region54: #{tpu_custom_call.1} parent=51 // pred_check_branch
          %1082 = sbr.rel (%p1080) target = $region56
        $region55: #{tpu_custom_call.1} parent=51 // pred_region
          %1084 = vsyncadd %s1076, 0
          %s1085 = smul.addr %s22, 8
          %s1086 = scalar_lea.hbm %s8, %s1085
          %s1088 = sshll.u32 %s1079, 4
          %s1089 = int_to_ptr.vmem [resolvable:$true] %s1088
          %s1090 = sshll.u32 %s1086, 4
          %s1091 = int_to_ptr.hbm [resolvable:$true] %s1090
          %1093 = dma.vmem_to_hbm [thread:$0]  %s1089, 128, %s1091, %s1076
        $region56: #{tpu_custom_call.1} parent=51 // pred_fallthru
          _
      $region52: #{tpu_custom_call.1} parent=5 // pred_fallthru
        _
      %p1094 = scmp.le.s32.totalorder 2, %s17
      // Predicated region
      $region57: #{tpu_custom_call.1} parent=5 // pred_check
        %p1095 = pneg %p1094
      $region58: #{tpu_custom_call.1} parent=5 // pred_check_branch
        %1097 = sbr.rel (%p1095) target = $region60
      $region59: #{tpu_custom_call.1} parent=5 // pred_region
        %s1098 = ssub.s32 %s17, 2
        // Predicated region
        $region61: #{tpu_custom_call.1} parent=59 // pred_check
          %p1099 = pneg %p234
        $region62: #{tpu_custom_call.1} parent=59 // pred_check_branch
          %1101 = sbr.rel (%p1099) target = $region64
        $region63: #{tpu_custom_call.1} parent=59 // pred_region
          %s1102 = sand.u32 %s219, 1
          %s1103 = scalar_lea.sflag [#allocation4], %s1102
          %s1104 = sand.u32 %s219, 1
          %s1105 = smul.addr %s1104, 8
          %s1106 = scalar_lea.vmem [#allocation3], %s1105
          %1108 = dma.done %s1103, 128
        $region64: #{tpu_custom_call.1} parent=59 // pred_fallthru
          _
      $region60: #{tpu_custom_call.1} parent=5 // pred_fallthru
        _
    $region6: #{tpu_custom_call.1} parent=1 // loop_footer
      %s21 = sadd.s32 1, %s17
    $region7: #{tpu_custom_call.1} parent=1 // loop_footer_branch
      %16 = sbr.rel target = $region3
    $region8: #{tpu_custom_call.1} parent=1 // loop_exit
      _
    %1109 = vsyncpa [#allocation4], 1
    %s1110 = scalar_lea.sflag [#allocation4], 1
    %1111 = vsyncpa %s1110, 1

</llo_original>
